<compile_context>
chip_gen: v6e
topology: v6e:2x2x1
jax: 0.10.0
libtpu: 0.0.40
codegen_flags: <defaults>
</compile_context>

<pallas_src>
import jax
import jax.numpy as jnp
from jax.experimental import pallas as pl
from jax.experimental.pallas import tpu as pltpu


def clip_lora_mlp_kernel(vf_ref, tf_ref, w1_ref, b1_ref, w2_ref, b2_ref,
                         out_ref, feats_ref):
    D = vf_ref.shape[1]
    cdt = w1_ref.dtype           # bf16 compute dtype for the MXU

    vf = vf_ref[...]             # already bf16 (cast in the wrapper)
    tf = tf_ref[...]

    # fusion == 'cat_mix_diff': build the (tb, 4D) fused feature block in VMEM at
    # lane-aligned offsets (D is a multiple of 128 for CLIP dims -> plain tile stores).
    feats_ref[:, 0 * D:1 * D] = vf
    feats_ref[:, 1 * D:2 * D] = tf
    feats_ref[:, 2 * D:3 * D] = vf * tf
    feats_ref[:, 3 * D:4 * D] = jnp.abs(vf - tf)

    # Single K=4D matmul against the stacked, BN-folded W1 (keeps accumulation in the MXU).
    h = jnp.dot(feats_ref[...], w1_ref[...], preferred_element_type=jnp.float32)
    h = jnp.maximum(h + b1_ref[...], 0.0)       # Linear bias (BN folded) + ReLU

    # Dropout(0.4): identity in eval mode.

    # Linear(512, n_cls) with n_cls padded to a lane-dense 128 multiple.
    out = jnp.dot(h.astype(cdt), w2_ref[...], preferred_element_type=jnp.float32) + b2_ref[...]
    out_ref[...] = out.astype(out_ref.dtype)


def fold_and_pack_params(params, weight_dtype=jnp.bfloat16, lane=128):
    """One-time host-side prep: fold eval-mode BN into W1/b1, keep W1 stacked (4D, HID),
    zero-pad the class dim to a multiple of 128, and cast weights to bf16."""
    gamma = params["gamma"].reshape(-1).astype(jnp.float32)
    beta = params["beta"].reshape(-1).astype(jnp.float32)
    mean = params["mean"].reshape(-1).astype(jnp.float32)
    var = params["var"].reshape(-1).astype(jnp.float32)
    w1 = params["w1"].astype(jnp.float32)           # (FEAT, HID)  (in, out) layout
    b1 = params["b1"].reshape(1, -1).astype(jnp.float32)
    w2 = params["w2"].astype(jnp.float32)           # (HID, n_cls)
    b2 = params["b2"].reshape(1, -1).astype(jnp.float32)

    eps = 1e-5
    scale = gamma * jax.lax.rsqrt(var + eps)        # (FEAT,)
    shift = beta - mean * scale                     # (FEAT,)
    w1f = w1 * scale[:, None]                       # folded W1
    b1f = b1 + shift[None, :] @ w1                  # folded bias (1, HID)

    hid = w1.shape[1]
    n_cls = w2.shape[1]
    n_pad = max(lane, -(-n_cls // lane) * lane)     # round n_cls up to >=128 multiple
    w2p = jnp.zeros((hid, n_pad), jnp.float32).at[:, :n_cls].set(w2)
    b2p = jnp.zeros((1, n_pad), jnp.float32).at[:, :n_cls].set(b2)

    return {
        "w1": w1f.astype(weight_dtype),              # stacked (4D, HID) bf16
        "b1": b1f,                                   # f32, added to f32 accumulator
        "w2": w2p.astype(weight_dtype),
        "b2": b2p,                                   # f32
        "n_cls": n_cls,
    }


def _rup(x, m):
    return -(-x // m) * m


def clip_lora_mlp(vf, tf, packed, tile_b=512, out_dtype=jnp.float32):
    B, D = vf.shape
    HID = packed["b1"].shape[1]
    NP = packed["w2"].shape[1]
    n_cls = packed["n_cls"]
    cdt = packed["w1"].dtype

    # bf16 activation I/O: cast in the wrapper so the kernel DMAs half the bytes.
    vf = vf.astype(cdt)
    tf = tf.astype(cdt)

    # Batch tiling: multiple of 8 sublanes; aim for >=2 grid steps (v7x megacore) when
    # the padded batch allows it, then pad B so the grid divides exactly.
    bp0 = _rup(B, 8)
    tb = max(8, min(tile_b, _rup(pl.cdiv(bp0, 2), 8)))
    bp = _rup(bp0, tb)
    if bp != B:
        pad = ((0, bp - B), (0, 0))
        vf = jnp.pad(vf, pad)
        tf = jnp.pad(tf, pad)

    act_spec = pl.BlockSpec((tb, D), lambda i: (i, 0))

    def pinned(shape):
        # Weights / biases: same block for every grid step -> DMA'd once per call.
        return pl.BlockSpec(shape, lambda i: (0, 0))

    w_item = jnp.dtype(cdt).itemsize
    cost = pl.CostEstimate(
        flops=2 * bp * (4 * D * HID + HID * NP),
        transcendentals=0,
        bytes_accessed=(2 * bp * D * w_item                       # activations in (bf16)
                        + (4 * D * HID + HID * NP) * w_item       # weights (one-shot)
                        + (HID + NP) * 4                          # biases (f32)
                        + bp * NP * jnp.dtype(out_dtype).itemsize))

    out = pl.pallas_call(
        clip_lora_mlp_kernel,
        out_shape=jax.ShapeDtypeStruct((bp, NP), out_dtype),
        grid=(bp // tb,),
        in_specs=[
            act_spec, act_spec,
            pinned((4 * D, HID)), pinned((1, HID)),
            pinned((HID, NP)), pinned((1, NP)),
        ],
        out_specs=pl.BlockSpec((tb, NP), lambda i: (i, 0)),
        scratch_shapes=[pltpu.VMEM((tb, 4 * D), cdt)],
        compiler_params=pltpu.CompilerParams(dimension_semantics=("parallel",)),
        cost_estimate=cost,
    )(vf, tf, packed["w1"], packed["b1"], packed["w2"], packed["b2"])

    return out[:B, :n_cls]


def reference(vf, tf, params):
    # Module-faithful f32 reference (BN not folded, explicit concat).
    feats = jnp.concatenate([vf, tf, vf * tf, jnp.abs(vf - tf)], axis=1)
    x = (feats - params["mean"]) / jnp.sqrt(params["var"] + 1e-5) * params["gamma"] + params["beta"]
    h = jnp.maximum(x @ params["w1"] + params["b1"], 0.0)
    return h @ params["w2"] + params["b2"]


if __name__ == "__main__":
    # Small shapes consistent with the module:
    #   d = clip.visual.output_dim = 128, fusion='cat_mix_diff' => feat = 4*d = 512
    #   hidden = 512, n_cls = 10, batch = 8
    B, D, HID, N_CLS = 8, 128, 512, 10
    FEAT = 4 * D

    key = jax.random.PRNGKey(0)
    k = jax.random.split(key, 10)

    # "CLIP" features (stand-in for clip.encode_image / clip.encode_text outputs)
    vf = jax.random.normal(k[0], (B, D), dtype=jnp.float32)
    tf = jax.random.normal(k[1], (B, D), dtype=jnp.float32)

    # Deterministic parameter init (synthetic, not a checkpoint load)
    params = {
        "gamma": 1.0 + 0.1 * jax.random.normal(k[2], (1, FEAT), dtype=jnp.float32),
        "beta":  0.1 * jax.random.normal(k[3], (1, FEAT), dtype=jnp.float32),
        "mean":  0.1 * jax.random.normal(k[4], (1, FEAT), dtype=jnp.float32),
        "var":   jnp.abs(1.0 + 0.1 * jax.random.normal(k[5], (1, FEAT), dtype=jnp.float32)),
        # PyTorch Linear weight is (out, in); we store (in, out) so kernel does x @ W.
        "w1": jax.random.normal(k[6], (FEAT, HID), dtype=jnp.float32) / jnp.sqrt(FEAT),
        "b1": 0.01 * jax.random.normal(k[7], (1, HID), dtype=jnp.float32),
        "w2": jax.random.normal(k[8], (HID, N_CLS), dtype=jnp.float32) / jnp.sqrt(HID),
        "b2": 0.01 * jax.random.normal(k[9], (1, N_CLS), dtype=jnp.float32),
    }

    packed = fold_and_pack_params(params)
    out = jax.block_until_ready(clip_lora_mlp(vf, tf, packed))
    ref = jax.block_until_ready(reference(vf, tf, params))

    assert out.shape == (B, N_CLS), out.shape
    # Tolerance relaxed vs f32 reference: weights AND activations are bf16 on the MXU
    # (accumulation is f32).
    err = float(jnp.max(jnp.abs(out - ref)))
    assert jnp.allclose(out, ref, atol=1e-1, rtol=5e-2), err
    print("KERNEL_OK")
</pallas_src>

<mosaic_0001>
module attributes {stable_mosaic.version = 11 : i64} {
  func.func @clip_lora_mlp_kernel(%arg0: i32, %arg1: memref<8x128xbf16, #tpu.memory_space<vmem>>, %arg2: memref<8x128xbf16, #tpu.memory_space<vmem>>, %arg3: memref<512x512xbf16, #tpu.memory_space<vmem>>, %arg4: memref<1x512xf32, #tpu.memory_space<vmem>>, %arg5: memref<512x128xbf16, #tpu.memory_space<vmem>>, %arg6: memref<1x128xf32, #tpu.memory_space<vmem>>, %arg7: memref<8x128xf32, #tpu.memory_space<vmem>>, %arg8: memref<8x512xbf16, #tpu.memory_space<vmem>>) attributes {dimension_semantics = [#tpu.dimension_semantics<parallel>], iteration_bounds = array<i64: 1>, scalar_prefetch = 0 : i64, scratch_operands = 1 : i64, tpu.core_type = #tpu.core_type<tc>, window_params = [{transform_indices = @transform_0, window_bounds = array<i64: 8, 128>}, {transform_indices = @transform_1, window_bounds = array<i64: 8, 128>}, {pipeline_mode = #tpu.pipeline_mode<synchronous>, transform_indices = @transform_2, window_bounds = array<i64: 512, 512>}, {pipeline_mode = #tpu.pipeline_mode<synchronous>, transform_indices = @transform_3, window_bounds = array<i64: 1, 512>}, {pipeline_mode = #tpu.pipeline_mode<synchronous>, transform_indices = @transform_4, window_bounds = array<i64: 512, 128>}, {pipeline_mode = #tpu.pipeline_mode<synchronous>, transform_indices = @transform_5, window_bounds = array<i64: 1, 128>}, {transform_indices = @transform_6, window_bounds = array<i64: 8, 128>}]} {
    %c0 = arith.constant 0 : index
    %c0_0 = arith.constant 0 : index
    %0 = vector.load %arg1[%c0, %c0_0] : memref<8x128xbf16, #tpu.memory_space<vmem>>, vector<8x128xbf16>
    %c0_1 = arith.constant 0 : index
    %c0_2 = arith.constant 0 : index
    %1 = vector.load %arg2[%c0_1, %c0_2] : memref<8x128xbf16, #tpu.memory_space<vmem>>, vector<8x128xbf16>
    %c0_3 = arith.constant 0 : index
    %c0_4 = arith.constant 0 : index
    %2 = vector.load %arg8[%c0_3, %c0_4] : memref<8x512xbf16, #tpu.memory_space<vmem>>, vector<8x128xbf16>
    tpu.vector_store %arg8[%c0_3, %c0_4], %0 {strides = array<i32>} : memref<8x512xbf16, #tpu.memory_space<vmem>>, vector<8x128xbf16>,
    %c0_5 = arith.constant 0 : index
    %c128 = arith.constant 128 : index
    %3 = vector.load %arg8[%c0_5, %c128] : memref<8x512xbf16, #tpu.memory_space<vmem>>, vector<8x128xbf16>
    tpu.vector_store %arg8[%c0_5, %c128], %1 {strides = array<i32>} : memref<8x512xbf16, #tpu.memory_space<vmem>>, vector<8x128xbf16>,
    %4 = arith.mulf %0, %1 : vector<8x128xbf16>
    %c0_6 = arith.constant 0 : index
    %c256 = arith.constant 256 : index
    %5 = vector.load %arg8[%c0_6, %c256] : memref<8x512xbf16, #tpu.memory_space<vmem>>, vector<8x128xbf16>
    tpu.vector_store %arg8[%c0_6, %c256], %4 {strides = array<i32>} : memref<8x512xbf16, #tpu.memory_space<vmem>>, vector<8x128xbf16>,
    %6 = arith.subf %0, %1 : vector<8x128xbf16>
    %7 = math.absf %6 : vector<8x128xbf16>
    %c0_7 = arith.constant 0 : index
    %c384 = arith.constant 384 : index
    %8 = vector.load %arg8[%c0_7, %c384] : memref<8x512xbf16, #tpu.memory_space<vmem>>, vector<8x128xbf16>
    tpu.vector_store %arg8[%c0_7, %c384], %7 {strides = array<i32>} : memref<8x512xbf16, #tpu.memory_space<vmem>>, vector<8x128xbf16>,
    %c0_8 = arith.constant 0 : index
    %c0_9 = arith.constant 0 : index
    %9 = vector.load %arg8[%c0_8, %c0_9] : memref<8x512xbf16, #tpu.memory_space<vmem>>, vector<8x512xbf16>
    %c0_10 = arith.constant 0 : index
    %c0_11 = arith.constant 0 : index
    %10 = vector.load %arg3[%c0_10, %c0_11] : memref<512x512xbf16, #tpu.memory_space<vmem>>, vector<512x512xbf16>
    %cst = arith.constant dense<0.000000e+00> : vector<8x512xf32>
    %11 = tpu.matmul %9, %10, %cst {dimension_numbers = #tpu.dot_dimension_numbers<[1], [0], [0], [1], [0, 0, 1, 1], [], []>} : vector<8x512xbf16>, vector<512x512xbf16>, vector<8x512xf32> -> vector<8x512xf32>
    %c0_12 = arith.constant 0 : index
    %c0_13 = arith.constant 0 : index
    %12 = vector.load %arg4[%c0_12, %c0_13] : memref<1x512xf32, #tpu.memory_space<vmem>>, vector<1x512xf32>
    %13 = vector.broadcast %12 : vector<1x512xf32> to vector<8x512xf32>
    %14 = arith.addf %11, %13 : vector<8x512xf32>
    %cst_14 = arith.constant 0.000000e+00 : f32
    %15 = vector.broadcast %cst_14 : f32 to vector<8x512xf32>
    %16 = arith.maximumf %14, %15 : vector<8x512xf32>
    %17 = arith.truncf %16 : vector<8x512xf32> to vector<8x512xbf16>
    %c0_15 = arith.constant 0 : index
    %c0_16 = arith.constant 0 : index
    %18 = vector.load %arg5[%c0_15, %c0_16] : memref<512x128xbf16, #tpu.memory_space<vmem>>, vector<512x128xbf16>
    %cst_17 = arith.constant dense<0.000000e+00> : vector<8x128xf32>
    %19 = tpu.matmul %17, %18, %cst_17 {dimension_numbers = #tpu.dot_dimension_numbers<[1], [0], [0], [1], [0, 0, 1, 1], [], []>} : vector<8x512xbf16>, vector<512x128xbf16>, vector<8x128xf32> -> vector<8x128xf32>
    %c0_18 = arith.constant 0 : index
    %c0_19 = arith.constant 0 : index
    %20 = vector.load %arg6[%c0_18, %c0_19] : memref<1x128xf32, #tpu.memory_space<vmem>>, vector<1x128xf32>
    %21 = vector.broadcast %20 : vector<1x128xf32> to vector<8x128xf32>
    %22 = arith.addf %19, %21 : vector<8x128xf32>
    %c0_20 = arith.constant 0 : index
    %c0_21 = arith.constant 0 : index
    %23 = vector.load %arg7[%c0_20, %c0_21] : memref<8x128xf32, #tpu.memory_space<vmem>>, vector<8x128xf32>
    tpu.vector_store %arg7[%c0_20, %c0_21], %22 {strides = array<i32>} : memref<8x128xf32, #tpu.memory_space<vmem>>, vector<8x128xf32>,
    return
  }
  func.func @transform_0(%arg0: i32) -> (i32, i32) {
    %c0_i32 = arith.constant 0 : i32
    %c0_i32_0 = arith.constant 0 : i32
    return %arg0, %c0_i32 : i32, i32
  }
  func.func @transform_1(%arg0: i32) -> (i32, i32) {
    %c0_i32 = arith.constant 0 : i32
    %c0_i32_0 = arith.constant 0 : i32
    return %arg0, %c0_i32 : i32, i32
  }
  func.func @transform_2(%arg0: i32) -> (i32, i32) {
    %c0_i32 = arith.constant 0 : i32
    %c0_i32_0 = arith.constant 0 : i32
    %c0_i32_1 = arith.constant 0 : i32
    return %c0_i32, %c0_i32_0 : i32, i32
  }
  func.func @transform_3(%arg0: i32) -> (i32, i32) {
    %c0_i32 = arith.constant 0 : i32
    %c0_i32_0 = arith.constant 0 : i32
    %c0_i32_1 = arith.constant 0 : i32
    return %c0_i32, %c0_i32_0 : i32, i32
  }
  func.func @transform_4(%arg0: i32) -> (i32, i32) {
    %c0_i32 = arith.constant 0 : i32
    %c0_i32_0 = arith.constant 0 : i32
    %c0_i32_1 = arith.constant 0 : i32
    return %c0_i32, %c0_i32_0 : i32, i32
  }
  func.func @transform_5(%arg0: i32) -> (i32, i32) {
    %c0_i32 = arith.constant 0 : i32
    %c0_i32_0 = arith.constant 0 : i32
    %c0_i32_1 = arith.constant 0 : i32
    return %c0_i32, %c0_i32_0 : i32, i32
  }
  func.func @transform_6(%arg0: i32) -> (i32, i32) {
    %c0_i32 = arith.constant 0 : i32
    %c0_i32_0 = arith.constant 0 : i32
    return %arg0, %c0_i32 : i32, i32
  }
}

</mosaic_0001>

<llo_original>
// kernel: tpu_custom_call.1
$region0: #{tpu_custom_call.1}
  #allocation0 [shape = 'u32[]', space=smem, size = 0x4, offset = 0x4, fixed_abs, tag = 'smem constant byte address 0x4 - core index']
  #allocation1 [shape = 'u32[144,128]{1,0:T(1,128)}', space=vmem, size = 0x12000, scoped, tag = 'internal scratch']
  #allocation2 [shape = 'bf16[8,512]{1,0:T(8,128)(2,1)}', space=vmem, size = 0x2000, scoped, tag = 'scratch operand']
  %s0 = inlined_call_operand.hbm [shape: bf16[8,128], index: 0, kind: input, shape index: {}]
  %s1 = inlined_call_operand.hbm [shape: bf16[8,128], index: 1, kind: input, shape index: {}]
  %s2 = inlined_call_operand.hbm [shape: bf16[512,512], index: 2, kind: input, shape index: {}]
  %s3 = inlined_call_operand.vmem [shape: f32[1,512], index: 3, kind: input, shape index: {}]
  %s4 = inlined_call_operand.hbm [shape: bf16[512,128], index: 4, kind: input, shape index: {}]
  %s5 = inlined_call_operand.vmem [shape: f32[1,128], index: 5, kind: input, shape index: {}]
  %s6 = inlined_call_operand.hbm [shape: f32[8,128], index: 6, kind: output, shape index: {}]
  %s7 = sld [smem:[#allocation0]]
  $region50: #{tpu_custom_call.1} parent=0
    _
  %s9 = ssub.s32 1, %s7
  %s10 = scalar_select 0, %s9, %s7
  $region1: #{tpu_custom_call.1} parent=0
    #allocation3 [shape = 'u8[2048]{0}', space=vmem, size = 0x800, scoped, tag = 'input window, operand 0, single buffered']
    #allocation4 [shape = 's32[1]{0}', space=sflag, size = 0x4, scoped, tag = 'scoped memory for tpu_custom_call.1']
    #allocation5 [shape = 's32[1]{0}', space=sflag, size = 0x4, scoped, tag = 'scoped memory for tpu_custom_call.1']
    #allocation6 [shape = 'u8[2048]{0}', space=vmem, size = 0x800, scoped, tag = 'input window, operand 1, single buffered']
    #allocation7 [shape = 's32[1]{0}', space=sflag, size = 0x4, scoped, tag = 'scoped memory for tpu_custom_call.1']
    #allocation8 [shape = 'u8[524288]{0}', space=vmem, size = 0x80000, scoped, tag = 'input window, operand 2, single buffered']
    #allocation9 [shape = 'u8[131072]{0}', space=vmem, size = 0x20000, scoped, tag = 'input window, operand 4, single buffered']
    #allocation10 [shape = 's32[1]{0}', space=sflag, size = 0x4, scoped, tag = 'scoped memory for tpu_custom_call.1']
    #allocation11 [shape = 'u8[4096]{0}', space=vmem, size = 0x1000, scoped, tag = 'output window, operand 0, single buffered']
    %11 = vsyncpa [#allocation4], 0
    %12 = vsyncpa [#allocation7], 0
    %13 = vsyncpa [#allocation10], 0
    %14 = vsyncpa [#allocation5], 0
    // Predicated region
    $region2: #{tpu_custom_call.1} parent=1 // pred_check
      _
    $region3: #{tpu_custom_call.1} parent=1 // pred_check_branch
      %16 = sbr.rel (0) target = $region5
    $region4: #{tpu_custom_call.1} parent=1 // pred_region
      %s18 = ssub.s32 64, 64
      %19 = vsyncadd [#allocation4], %s18
      %s21 = sshll.u32 [#allocation3], 4
      %s22 = int_to_ptr.vmem [resolvable:$true] %s21
      %24 = dma.hbm_to_vmem [thread:$0]  %s0, 64, %s22, [#allocation4]
    $region5: #{tpu_custom_call.1} parent=1 // pred_fallthru
      _
    // Predicated region
    $region6: #{tpu_custom_call.1} parent=1 // pred_check
      _
    $region7: #{tpu_custom_call.1} parent=1 // pred_check_branch
      %26 = sbr.rel (0) target = $region9
    $region8: #{tpu_custom_call.1} parent=1 // pred_region
      %s28 = ssub.s32 64, 64
      %29 = vsyncadd [#allocation7], %s28
      %s31 = sshll.u32 [#allocation6], 4
      %s32 = int_to_ptr.vmem [resolvable:$true] %s31
      %34 = dma.hbm_to_vmem [thread:$0]  %s1, 64, %s32, [#allocation7]
    $region9: #{tpu_custom_call.1} parent=1 // pred_fallthru
      _
    // Predicated region
    $region10: #{tpu_custom_call.1} parent=1 // pred_check
      _
    $region11: #{tpu_custom_call.1} parent=1 // pred_check_branch
      %36 = sbr.rel (0) target = $region13
    $region12: #{tpu_custom_call.1} parent=1 // pred_region
      %s38 = ssub.s32 16384, 16384
      %39 = vsyncadd [#allocation7], %s38
      %s40 = sshll.u32 [#allocation8], 4
      %s41 = int_to_ptr.vmem [resolvable:$true] %s40
      %46 = dma.hbm_to_vmem [thread:$0]  %s2, 16384, %s41, [#allocation7], 256, 256, 16
    $region13: #{tpu_custom_call.1} parent=1 // pred_fallthru
      _
    // Predicated region
    $region14: #{tpu_custom_call.1} parent=1 // pred_check
      _
    $region15: #{tpu_custom_call.1} parent=1 // pred_check_branch
      %48 = sbr.rel (0) target = $region17
    $region16: #{tpu_custom_call.1} parent=1 // pred_region
      _
    $region17: #{tpu_custom_call.1} parent=1 // pred_fallthru
      _
    // Predicated region
    $region18: #{tpu_custom_call.1} parent=1 // pred_check
      _
    $region19: #{tpu_custom_call.1} parent=1 // pred_check_branch
      %50 = sbr.rel (0) target = $region21
    $region20: #{tpu_custom_call.1} parent=1 // pred_region
      %s52 = ssub.s32 4096, 4096
      %53 = vsyncadd [#allocation10], %s52
      %s54 = sshll.u32 [#allocation9], 4
      %s55 = int_to_ptr.vmem [resolvable:$true] %s54
      %60 = dma.hbm_to_vmem [thread:$0]  %s4, 4096, %s55, [#allocation10], 64, 64, 4
    $region21: #{tpu_custom_call.1} parent=1 // pred_fallthru
      _
    // Predicated region
    $region22: #{tpu_custom_call.1} parent=1 // pred_check
      _
    $region23: #{tpu_custom_call.1} parent=1 // pred_check_branch
      %62 = sbr.rel (0) target = $region25
    $region24: #{tpu_custom_call.1} parent=1 // pred_region
      _
    $region25: #{tpu_custom_call.1} parent=1 // pred_fallthru
      _
    // Predicated region
    $region26: #{tpu_custom_call.1} parent=1 // pred_check
      _
    $region27: #{tpu_custom_call.1} parent=1 // pred_check_branch
      %64 = sbr.rel (0) target = $region29
    $region28: #{tpu_custom_call.1} parent=1 // pred_region
      %65 = dma.done [#allocation4], 64
    $region29: #{tpu_custom_call.1} parent=1 // pred_fallthru
      _
    // Predicated region
    $region30: #{tpu_custom_call.1} parent=1 // pred_check
      _
    $region31: #{tpu_custom_call.1} parent=1 // pred_check_branch
      %67 = sbr.rel (0) target = $region33
    $region32: #{tpu_custom_call.1} parent=1 // pred_region
      %68 = dma.done [#allocation7], 64
    $region33: #{tpu_custom_call.1} parent=1 // pred_fallthru
      _
    // Predicated region
    $region34: #{tpu_custom_call.1} parent=1 // pred_check
      _
    $region35: #{tpu_custom_call.1} parent=1 // pred_check_branch
      %70 = sbr.rel (0) target = $region37
    $region36: #{tpu_custom_call.1} parent=1 // pred_region
      %71 = dma.done [#allocation7], 16384
    $region37: #{tpu_custom_call.1} parent=1 // pred_fallthru
      _
    // Predicated region
    $region38: #{tpu_custom_call.1} parent=1 // pred_check
      _
    $region39: #{tpu_custom_call.1} parent=1 // pred_check_branch
      %73 = sbr.rel (0) target = $region41
    $region40: #{tpu_custom_call.1} parent=1 // pred_region
      %74 = dma.done [#allocation10], 4096
    $region41: #{tpu_custom_call.1} parent=1 // pred_fallthru
      _
    %v76 = vld [vmem:[#allocation3] sm:$0xf]
    %v77 = vld [vmem:[#allocation6] sm:$0xf]
    %78 = vst [vmem:[#allocation2] sm:$0xf] %v76
    %79 = vst [vmem:[#allocation2 + $0x4] sm:$0xf] %v77
    %v80 = vmul.bf16 %v76, %v77
    %81 = vst [vmem:[#allocation2 + $0x8] sm:$0xf] %v80
    %v82 = vsub.bf16 %v76, %v77
    %v83 = vand.u32 2147450879, %v82
    %84 = vst [vmem:[#allocation2 + $0xc] sm:$0xf] %v83
    %v85 = vld [vmem:[#allocation2] sm:$0xff]
    %v86 = vld [vmem:[#allocation2 + $0x8] sm:$0xff]
    %v87 = vld [vmem:[#allocation8] sm:$0xff]
    %v88 = vld [vmem:[#allocation8 + $0x8] sm:$0xff]
    %v89 = vld [vmem:[#allocation8 + $0x10] sm:$0xff]
    %v90 = vld [vmem:[#allocation8 + $0x18] sm:$0xff]
    %v91 = vld [vmem:[#allocation8 + $0x20] sm:$0xff]
    %v92 = vld [vmem:[#allocation8 + $0x28] sm:$0xff]
    %v93 = vld [vmem:[#allocation8 + $0x30] sm:$0xff]
    %v94 = vld [vmem:[#allocation8 + $0x38] sm:$0xff]
    %v95 = vld [vmem:[#allocation8 + $0x40] sm:$0xff]
    %v96 = vld [vmem:[#allocation8 + $0x48] sm:$0xff]
    %v97 = vld [vmem:[#allocation8 + $0x50] sm:$0xff]
    %v98 = vld [vmem:[#allocation8 + $0x58] sm:$0xff]
    %v99 = vld [vmem:[#allocation8 + $0x60] sm:$0xff]
    %v100 = vld [vmem:[#allocation8 + $0x68] sm:$0xff]
    %v101 = vld [vmem:[#allocation8 + $0x70] sm:$0xff]
    %v102 = vld [vmem:[#allocation8 + $0x78] sm:$0xff]
    %v103 = vld [vmem:[#allocation8 + $0x80] sm:$0xff]
    %v104 = vld [vmem:[#allocation8 + $0x88] sm:$0xff]
    %v105 = vld [vmem:[#allocation8 + $0x90] sm:$0xff]
    %v106 = vld [vmem:[#allocation8 + $0x98] sm:$0xff]
    %v107 = vld [vmem:[#allocation8 + $0xa0] sm:$0xff]
    %v108 = vld [vmem:[#allocation8 + $0xa8] sm:$0xff]
    %v109 = vld [vmem:[#allocation8 + $0xb0] sm:$0xff]
    %v110 = vld [vmem:[#allocation8 + $0xb8] sm:$0xff]
    %v111 = vld [vmem:[#allocation8 + $0xc0] sm:$0xff]
    %v112 = vld [vmem:[#allocation8 + $0xc8] sm:$0xff]
    %v113 = vld [vmem:[#allocation8 + $0xd0] sm:$0xff]
    %v114 = vld [vmem:[#allocation8 + $0xd8] sm:$0xff]
    %v115 = vld [vmem:[#allocation8 + $0xe0] sm:$0xff]
    %v116 = vld [vmem:[#allocation8 + $0xe8] sm:$0xff]
    %v117 = vld [vmem:[#allocation8 + $0xf0] sm:$0xff]
    %v118 = vld [vmem:[#allocation8 + $0xf8] sm:$0xff]
    %v119 = vld [vmem:[#allocation8 + $0x100] sm:$0xff]
    %v120 = vld [vmem:[#allocation8 + $0x108] sm:$0xff]
    %v121 = vld [vmem:[#allocation8 + $0x110] sm:$0xff]
    %v122 = vld [vmem:[#allocation8 + $0x118] sm:$0xff]
    %v123 = vld [vmem:[#allocation8 + $0x120] sm:$0xff]
    %v124 = vld [vmem:[#allocation8 + $0x128] sm:$0xff]
    %v125 = vld [vmem:[#allocation8 + $0x130] sm:$0xff]
    %v126 = vld [vmem:[#allocation8 + $0x138] sm:$0xff]
    %v127 = vld [vmem:[#allocation8 + $0x140] sm:$0xff]
    %v128 = vld [vmem:[#allocation8 + $0x148] sm:$0xff]
    %v129 = vld [vmem:[#allocation8 + $0x150] sm:$0xff]
    %v130 = vld [vmem:[#allocation8 + $0x158] sm:$0xff]
    %v131 = vld [vmem:[#allocation8 + $0x160] sm:$0xff]
    %v132 = vld [vmem:[#allocation8 + $0x168] sm:$0xff]
    %v133 = vld [vmem:[#allocation8 + $0x170] sm:$0xff]
    %v134 = vld [vmem:[#allocation8 + $0x178] sm:$0xff]
    %v135 = vld [vmem:[#allocation8 + $0x180] sm:$0xff]
    %v136 = vld [vmem:[#allocation8 + $0x188] sm:$0xff]
    %v137 = vld [vmem:[#allocation8 + $0x190] sm:$0xff]
    %v138 = vld [vmem:[#allocation8 + $0x198] sm:$0xff]
    %v139 = vld [vmem:[#allocation8 + $0x1a0] sm:$0xff]
    %v140 = vld [vmem:[#allocation8 + $0x1a8] sm:$0xff]
    %v141 = vld [vmem:[#allocation8 + $0x1b0] sm:$0xff]
    %v142 = vld [vmem:[#allocation8 + $0x1b8] sm:$0xff]
    %v143 = vld [vmem:[#allocation8 + $0x1c0] sm:$0xff]
    %v144 = vld [vmem:[#allocation8 + $0x1c8] sm:$0xff]
    %v145 = vld [vmem:[#allocation8 + $0x1d0] sm:$0xff]
    %v146 = vld [vmem:[#allocation8 + $0x1d8] sm:$0xff]
    %v147 = vld [vmem:[#allocation8 + $0x1e0] sm:$0xff]
    %v148 = vld [vmem:[#allocation8 + $0x1e8] sm:$0xff]
    %v149 = vld [vmem:[#allocation8 + $0x1f0] sm:$0xff]
    %v150 = vld [vmem:[#allocation8 + $0x1f8] sm:$0xff]
    %v151 = vld [vmem:[#allocation8 + $0x200] sm:$0xff]
    %v152 = vld [vmem:[#allocation8 + $0x208] sm:$0xff]
    %v153 = vld [vmem:[#allocation8 + $0x210] sm:$0xff]
    %v154 = vld [vmem:[#allocation8 + $0x218] sm:$0xff]
    %v155 = vld [vmem:[#allocation8 + $0x220] sm:$0xff]
    %v156 = vld [vmem:[#allocation8 + $0x228] sm:$0xff]
    %v157 = vld [vmem:[#allocation8 + $0x230] sm:$0xff]
    %v158 = vld [vmem:[#allocation8 + $0x238] sm:$0xff]
    %v159 = vld [vmem:[#allocation8 + $0x240] sm:$0xff]
    %v160 = vld [vmem:[#allocation8 + $0x248] sm:$0xff]
    %v161 = vld [vmem:[#allocation8 + $0x250] sm:$0xff]
    %v162 = vld [vmem:[#allocation8 + $0x258] sm:$0xff]
    %v163 = vld [vmem:[#allocation8 + $0x260] sm:$0xff]
    %v164 = vld [vmem:[#allocation8 + $0x268] sm:$0xff]
    %v165 = vld [vmem:[#allocation8 + $0x270] sm:$0xff]
    %v166 = vld [vmem:[#allocation8 + $0x278] sm:$0xff]
    %v167 = vld [vmem:[#allocation8 + $0x280] sm:$0xff]
    %v168 = vld [vmem:[#allocation8 + $0x288] sm:$0xff]
    %v169 = vld [vmem:[#allocation8 + $0x290] sm:$0xff]
    %v170 = vld [vmem:[#allocation8 + $0x298] sm:$0xff]
    %v171 = vld [vmem:[#allocation8 + $0x2a0] sm:$0xff]
    %v172 = vld [vmem:[#allocation8 + $0x2a8] sm:$0xff]
    %v173 = vld [vmem:[#allocation8 + $0x2b0] sm:$0xff]
    %v174 = vld [vmem:[#allocation8 + $0x2b8] sm:$0xff]
    %v175 = vld [vmem:[#allocation8 + $0x2c0] sm:$0xff]
    %v176 = vld [vmem:[#allocation8 + $0x2c8] sm:$0xff]
    %v177 = vld [vmem:[#allocation8 + $0x2d0] sm:$0xff]
    %v178 = vld [vmem:[#allocation8 + $0x2d8] sm:$0xff]
    %v179 = vld [vmem:[#allocation8 + $0x2e0] sm:$0xff]
    %v180 = vld [vmem:[#allocation8 + $0x2e8] sm:$0xff]
    %v181 = vld [vmem:[#allocation8 + $0x2f0] sm:$0xff]
    %v182 = vld [vmem:[#allocation8 + $0x2f8] sm:$0xff]
    %v183 = vld [vmem:[#allocation8 + $0x300] sm:$0xff]
    %v184 = vld [vmem:[#allocation8 + $0x308] sm:$0xff]
    %v185 = vld [vmem:[#allocation8 + $0x310] sm:$0xff]
    %v186 = vld [vmem:[#allocation8 + $0x318] sm:$0xff]
    %v187 = vld [vmem:[#allocation8 + $0x320] sm:$0xff]
    %v188 = vld [vmem:[#allocation8 + $0x328] sm:$0xff]
    %v189 = vld [vmem:[#allocation8 + $0x330] sm:$0xff]
    %v190 = vld [vmem:[#allocation8 + $0x338] sm:$0xff]
    %v191 = vld [vmem:[#allocation8 + $0x340] sm:$0xff]
    %v192 = vld [vmem:[#allocation8 + $0x348] sm:$0xff]
    %v193 = vld [vmem:[#allocation8 + $0x350] sm:$0xff]
    %v194 = vld [vmem:[#allocation8 + $0x358] sm:$0xff]
    %v195 = vld [vmem:[#allocation8 + $0x360] sm:$0xff]
    %v196 = vld [vmem:[#allocation8 + $0x368] sm:$0xff]
    %v197 = vld [vmem:[#allocation8 + $0x370] sm:$0xff]
    %v198 = vld [vmem:[#allocation8 + $0x378] sm:$0xff]
    %v199 = vld [vmem:[#allocation8 + $0x380] sm:$0xff]
    %v200 = vld [vmem:[#allocation8 + $0x388] sm:$0xff]
    %v201 = vld [vmem:[#allocation8 + $0x390] sm:$0xff]
    %v202 = vld [vmem:[#allocation8 + $0x398] sm:$0xff]
    %v203 = vld [vmem:[#allocation8 + $0x3a0] sm:$0xff]
    %v204 = vld [vmem:[#allocation8 + $0x3a8] sm:$0xff]
    %v205 = vld [vmem:[#allocation8 + $0x3b0] sm:$0xff]
    %v206 = vld [vmem:[#allocation8 + $0x3b8] sm:$0xff]
    %v207 = vld [vmem:[#allocation8 + $0x3c0] sm:$0xff]
    %v208 = vld [vmem:[#allocation8 + $0x3c8] sm:$0xff]
    %v209 = vld [vmem:[#allocation8 + $0x3d0] sm:$0xff]
    %v210 = vld [vmem:[#allocation8 + $0x3d8] sm:$0xff]
    %v211 = vld [vmem:[#allocation8 + $0x3e0] sm:$0xff]
    %v212 = vld [vmem:[#allocation8 + $0x3e8] sm:$0xff]
    %v213 = vld [vmem:[#allocation8 + $0x3f0] sm:$0xff]
    %v214 = vld [vmem:[#allocation8 + $0x3f8] sm:$0xff]
    %v215 = vld [vmem:[%s3] sm:$0xf]
    %v217 = vlaneseq
    %v218 = vshrl.u32 %v217, 7
    %v219 = vsub.s32 0, %v218
    %v220 = vrot.slane %v215, %v219
    %v221 = vlaneseq
    %v222 = vshrl.u32 %v221, 7
    %v223 = vsub.s32 1, %v222
    %v224 = vrot.slane %v215, %v223
    %v225 = vlaneseq
    %v226 = vshrl.u32 %v225, 7
    %v227 = vsub.s32 2, %v226
    %v228 = vrot.slane %v215, %v227
    %v229 = vlaneseq
    %v230 = vshrl.u32 %v229, 7
    %v231 = vsub.s32 3, %v230
    %v232 = vrot.slane %v215, %v231
    %v239 = vunpack.c.l.b16 %v85
    %v240 = vunpack.c.h.b16 %v85
    %v241 = vunpack.c.l.b16 %v86
    %v242 = vunpack.c.h.b16 %v86
    %v243 = vpack.c.b16 %v239, %v239
    %v244 = vpack.c.b16 %v240, %v240
    %v245 = vpack.c.b16 %v241, %v241
    %v246 = vpack.c.b16 %v242, %v242
    %v379 = vunpack.c.l.b16 %v87
    %v380 = vunpack.c.h.b16 %v87
    %v381 = vunpack.c.l.b16 %v88
    %v382 = vunpack.c.h.b16 %v88
    %v383 = vunpack.c.l.b16 %v89
    %v384 = vunpack.c.h.b16 %v89
    %v385 = vunpack.c.l.b16 %v90
    %v386 = vunpack.c.h.b16 %v90
    %v387 = vunpack.c.l.b16 %v91
    %v388 = vunpack.c.h.b16 %v91
    %v389 = vunpack.c.l.b16 %v92
    %v390 = vunpack.c.h.b16 %v92
    %v391 = vunpack.c.l.b16 %v93
    %v392 = vunpack.c.h.b16 %v93
    %v393 = vunpack.c.l.b16 %v94
    %v394 = vunpack.c.h.b16 %v94
    %v395 = vunpack.c.l.b16 %v95
    %v396 = vunpack.c.h.b16 %v95
    %v397 = vunpack.c.l.b16 %v96
    %v398 = vunpack.c.h.b16 %v96
    %v399 = vunpack.c.l.b16 %v97
    %v400 = vunpack.c.h.b16 %v97
    %v401 = vunpack.c.l.b16 %v98
    %v402 = vunpack.c.h.b16 %v98
    %v403 = vunpack.c.l.b16 %v99
    %v404 = vunpack.c.h.b16 %v99
    %v405 = vunpack.c.l.b16 %v100
    %v406 = vunpack.c.h.b16 %v100
    %v407 = vunpack.c.l.b16 %v101
    %v408 = vunpack.c.h.b16 %v101
    %v409 = vunpack.c.l.b16 %v102
    %v410 = vunpack.c.h.b16 %v102
    %v411 = vunpack.c.l.b16 %v103
    %v412 = vunpack.c.h.b16 %v103
    %v413 = vunpack.c.l.b16 %v104
    %v414 = vunpack.c.h.b16 %v104
    %v415 = vunpack.c.l.b16 %v105
    %v416 = vunpack.c.h.b16 %v105
    %v417 = vunpack.c.l.b16 %v106
    %v418 = vunpack.c.h.b16 %v106
    %v419 = vunpack.c.l.b16 %v107
    %v420 = vunpack.c.h.b16 %v107
    %v421 = vunpack.c.l.b16 %v108
    %v422 = vunpack.c.h.b16 %v108
    %v423 = vunpack.c.l.b16 %v109
    %v424 = vunpack.c.h.b16 %v109
    %v425 = vunpack.c.l.b16 %v110
    %v426 = vunpack.c.h.b16 %v110
    %v427 = vunpack.c.l.b16 %v111
    %v428 = vunpack.c.h.b16 %v111
    %v429 = vunpack.c.l.b16 %v112
    %v430 = vunpack.c.h.b16 %v112
    %v431 = vunpack.c.l.b16 %v113
    %v432 = vunpack.c.h.b16 %v113
    %v433 = vunpack.c.l.b16 %v114
    %v434 = vunpack.c.h.b16 %v114
    %v435 = vunpack.c.l.b16 %v115
    %v436 = vunpack.c.h.b16 %v115
    %v437 = vunpack.c.l.b16 %v116
    %v438 = vunpack.c.h.b16 %v116
    %v439 = vunpack.c.l.b16 %v117
    %v440 = vunpack.c.h.b16 %v117
    %v441 = vunpack.c.l.b16 %v118
    %v442 = vunpack.c.h.b16 %v118
    %v443 = vunpack.c.l.b16 %v119
    %v444 = vunpack.c.h.b16 %v119
    %v445 = vunpack.c.l.b16 %v120
    %v446 = vunpack.c.h.b16 %v120
    %v447 = vunpack.c.l.b16 %v121
    %v448 = vunpack.c.h.b16 %v121
    %v449 = vunpack.c.l.b16 %v122
    %v450 = vunpack.c.h.b16 %v122
    %v451 = vunpack.c.l.b16 %v123
    %v452 = vunpack.c.h.b16 %v123
    %v453 = vunpack.c.l.b16 %v124
    %v454 = vunpack.c.h.b16 %v124
    %v455 = vunpack.c.l.b16 %v125
    %v456 = vunpack.c.h.b16 %v125
    %v457 = vunpack.c.l.b16 %v126
    %v458 = vunpack.c.h.b16 %v126
    %v459 = vunpack.c.l.b16 %v127
    %v460 = vunpack.c.h.b16 %v127
    %v461 = vunpack.c.l.b16 %v128
    %v462 = vunpack.c.h.b16 %v128
    %v463 = vunpack.c.l.b16 %v129
    %v464 = vunpack.c.h.b16 %v129
    %v465 = vunpack.c.l.b16 %v130
    %v466 = vunpack.c.h.b16 %v130
    %v467 = vunpack.c.l.b16 %v131
    %v468 = vunpack.c.h.b16 %v131
    %v469 = vunpack.c.l.b16 %v132
    %v470 = vunpack.c.h.b16 %v132
    %v471 = vunpack.c.l.b16 %v133
    %v472 = vunpack.c.h.b16 %v133
    %v473 = vunpack.c.l.b16 %v134
    %v474 = vunpack.c.h.b16 %v134
    %v475 = vunpack.c.l.b16 %v135
    %v476 = vunpack.c.h.b16 %v135
    %v477 = vunpack.c.l.b16 %v136
    %v478 = vunpack.c.h.b16 %v136
    %v479 = vunpack.c.l.b16 %v137
    %v480 = vunpack.c.h.b16 %v137
    %v481 = vunpack.c.l.b16 %v138
    %v482 = vunpack.c.h.b16 %v138
    %v483 = vunpack.c.l.b16 %v139
    %v484 = vunpack.c.h.b16 %v139
    %v485 = vunpack.c.l.b16 %v140
    %v486 = vunpack.c.h.b16 %v140
    %v487 = vunpack.c.l.b16 %v141
    %v488 = vunpack.c.h.b16 %v141
    %v489 = vunpack.c.l.b16 %v142
    %v490 = vunpack.c.h.b16 %v142
    %v491 = vunpack.c.l.b16 %v143
    %v492 = vunpack.c.h.b16 %v143
    %v493 = vunpack.c.l.b16 %v144
    %v494 = vunpack.c.h.b16 %v144
    %v495 = vunpack.c.l.b16 %v145
    %v496 = vunpack.c.h.b16 %v145
    %v497 = vunpack.c.l.b16 %v146
    %v498 = vunpack.c.h.b16 %v146
    %v499 = vunpack.c.l.b16 %v147
    %v500 = vunpack.c.h.b16 %v147
    %v501 = vunpack.c.l.b16 %v148
    %v502 = vunpack.c.h.b16 %v148
    %v503 = vunpack.c.l.b16 %v149
    %v504 = vunpack.c.h.b16 %v149
    %v505 = vunpack.c.l.b16 %v150
    %v506 = vunpack.c.h.b16 %v150
    %v507 = vunpack.c.l.b16 %v151
    %v508 = vunpack.c.h.b16 %v151
    %v509 = vunpack.c.l.b16 %v152
    %v510 = vunpack.c.h.b16 %v152
    %v511 = vunpack.c.l.b16 %v153
    %v512 = vunpack.c.h.b16 %v153
    %v513 = vunpack.c.l.b16 %v154
    %v514 = vunpack.c.h.b16 %v154
    %v515 = vunpack.c.l.b16 %v155
    %v516 = vunpack.c.h.b16 %v155
    %v517 = vunpack.c.l.b16 %v156
    %v518 = vunpack.c.h.b16 %v156
    %v519 = vunpack.c.l.b16 %v157
    %v520 = vunpack.c.h.b16 %v157
    %v521 = vunpack.c.l.b16 %v158
    %v522 = vunpack.c.h.b16 %v158
    %v523 = vunpack.c.l.b16 %v159
    %v524 = vunpack.c.h.b16 %v159
    %v525 = vunpack.c.l.b16 %v160
    %v526 = vunpack.c.h.b16 %v160
    %v527 = vunpack.c.l.b16 %v161
    %v528 = vunpack.c.h.b16 %v161
    %v529 = vunpack.c.l.b16 %v162
    %v530 = vunpack.c.h.b16 %v162
    %v531 = vunpack.c.l.b16 %v163
    %v532 = vunpack.c.h.b16 %v163
    %v533 = vunpack.c.l.b16 %v164
    %v534 = vunpack.c.h.b16 %v164
    %v535 = vunpack.c.l.b16 %v165
    %v536 = vunpack.c.h.b16 %v165
    %v537 = vunpack.c.l.b16 %v166
    %v538 = vunpack.c.h.b16 %v166
    %v539 = vunpack.c.l.b16 %v167
    %v540 = vunpack.c.h.b16 %v167
    %v541 = vunpack.c.l.b16 %v168
    %v542 = vunpack.c.h.b16 %v168
    %v543 = vunpack.c.l.b16 %v169
    %v544 = vunpack.c.h.b16 %v169
    %v545 = vunpack.c.l.b16 %v170
    %v546 = vunpack.c.h.b16 %v170
    %v547 = vunpack.c.l.b16 %v171
    %v548 = vunpack.c.h.b16 %v171
    %v549 = vunpack.c.l.b16 %v172
    %v550 = vunpack.c.h.b16 %v172
    %v551 = vunpack.c.l.b16 %v173
    %v552 = vunpack.c.h.b16 %v173
    %v553 = vunpack.c.l.b16 %v174
    %v554 = vunpack.c.h.b16 %v174
    %v555 = vunpack.c.l.b16 %v175
    %v556 = vunpack.c.h.b16 %v175
    %v557 = vunpack.c.l.b16 %v176
    %v558 = vunpack.c.h.b16 %v176
    %v559 = vunpack.c.l.b16 %v177
    %v560 = vunpack.c.h.b16 %v177
    %v561 = vunpack.c.l.b16 %v178
    %v562 = vunpack.c.h.b16 %v178
    %v563 = vunpack.c.l.b16 %v179
    %v564 = vunpack.c.h.b16 %v179
    %v565 = vunpack.c.l.b16 %v180
    %v566 = vunpack.c.h.b16 %v180
    %v567 = vunpack.c.l.b16 %v181
    %v568 = vunpack.c.h.b16 %v181
    %v569 = vunpack.c.l.b16 %v182
    %v570 = vunpack.c.h.b16 %v182
    %v571 = vunpack.c.l.b16 %v183
    %v572 = vunpack.c.h.b16 %v183
    %v573 = vunpack.c.l.b16 %v184
    %v574 = vunpack.c.h.b16 %v184
    %v575 = vunpack.c.l.b16 %v185
    %v576 = vunpack.c.h.b16 %v185
    %v577 = vunpack.c.l.b16 %v186
    %v578 = vunpack.c.h.b16 %v186
    %v579 = vunpack.c.l.b16 %v187
    %v580 = vunpack.c.h.b16 %v187
    %v581 = vunpack.c.l.b16 %v188
    %v582 = vunpack.c.h.b16 %v188
    %v583 = vunpack.c.l.b16 %v189
    %v584 = vunpack.c.h.b16 %v189
    %v585 = vunpack.c.l.b16 %v190
    %v586 = vunpack.c.h.b16 %v190
    %v587 = vunpack.c.l.b16 %v191
    %v588 = vunpack.c.h.b16 %v191
    %v589 = vunpack.c.l.b16 %v192
    %v590 = vunpack.c.h.b16 %v192
    %v591 = vunpack.c.l.b16 %v193
    %v592 = vunpack.c.h.b16 %v193
    %v593 = vunpack.c.l.b16 %v194
    %v594 = vunpack.c.h.b16 %v194
    %v595 = vunpack.c.l.b16 %v195
    %v596 = vunpack.c.h.b16 %v195
    %v597 = vunpack.c.l.b16 %v196
    %v598 = vunpack.c.h.b16 %v196
    %v599 = vunpack.c.l.b16 %v197
    %v600 = vunpack.c.h.b16 %v197
    %v601 = vunpack.c.l.b16 %v198
    %v602 = vunpack.c.h.b16 %v198
    %v603 = vunpack.c.l.b16 %v199
    %v604 = vunpack.c.h.b16 %v199
    %v605 = vunpack.c.l.b16 %v200
    %v606 = vunpack.c.h.b16 %v200
    %v607 = vunpack.c.l.b16 %v201
    %v608 = vunpack.c.h.b16 %v201
    %v609 = vunpack.c.l.b16 %v202
    %v610 = vunpack.c.h.b16 %v202
    %v611 = vunpack.c.l.b16 %v203
    %v612 = vunpack.c.h.b16 %v203
    %v613 = vunpack.c.l.b16 %v204
    %v614 = vunpack.c.h.b16 %v204
    %v615 = vunpack.c.l.b16 %v205
    %v616 = vunpack.c.h.b16 %v205
    %v617 = vunpack.c.l.b16 %v206
    %v618 = vunpack.c.h.b16 %v206
    %v619 = vunpack.c.l.b16 %v207
    %v620 = vunpack.c.h.b16 %v207
    %v621 = vunpack.c.l.b16 %v208
    %v622 = vunpack.c.h.b16 %v208
    %v623 = vunpack.c.l.b16 %v209
    %v624 = vunpack.c.h.b16 %v209
    %v625 = vunpack.c.l.b16 %v210
    %v626 = vunpack.c.h.b16 %v210
    %v627 = vunpack.c.l.b16 %v211
    %v628 = vunpack.c.h.b16 %v211
    %v629 = vunpack.c.l.b16 %v212
    %v630 = vunpack.c.h.b16 %v212
    %v631 = vunpack.c.l.b16 %v213
    %v632 = vunpack.c.h.b16 %v213
    %v633 = vunpack.c.l.b16 %v214
    %v634 = vunpack.c.h.b16 %v214
    %v635 = vpack.c.b16 %v383, %v379
    %v636 = vpack.c.b16 %v384, %v380
    %v637 = vpack.c.b16 %v385, %v381
    %v638 = vpack.c.b16 %v386, %v382
    %v639 = vpack.c.b16 %v391, %v387
    %v640 = vpack.c.b16 %v392, %v388
    %v641 = vpack.c.b16 %v393, %v389
    %v642 = vpack.c.b16 %v394, %v390
    %v643 = vpack.c.b16 %v399, %v395
    %v644 = vpack.c.b16 %v400, %v396
    %v645 = vpack.c.b16 %v401, %v397
    %v646 = vpack.c.b16 %v402, %v398
    %v647 = vpack.c.b16 %v407, %v403
    %v648 = vpack.c.b16 %v408, %v404
    %v649 = vpack.c.b16 %v409, %v405
    %v650 = vpack.c.b16 %v410, %v406
    %v651 = vpack.c.b16 %v415, %v411
    %v652 = vpack.c.b16 %v416, %v412
    %v653 = vpack.c.b16 %v417, %v413
    %v654 = vpack.c.b16 %v418, %v414
    %v655 = vpack.c.b16 %v423, %v419
    %v656 = vpack.c.b16 %v424, %v420
    %v657 = vpack.c.b16 %v425, %v421
    %v658 = vpack.c.b16 %v426, %v422
    %v659 = vpack.c.b16 %v431, %v427
    %v660 = vpack.c.b16 %v432, %v428
    %v661 = vpack.c.b16 %v433, %v429
    %v662 = vpack.c.b16 %v434, %v430
    %v663 = vpack.c.b16 %v439, %v435
    %v664 = vpack.c.b16 %v440, %v436
    %v665 = vpack.c.b16 %v441, %v437
    %v666 = vpack.c.b16 %v442, %v438
    %v667 = vpack.c.b16 %v447, %v443
    %v668 = vpack.c.b16 %v448, %v444
    %v669 = vpack.c.b16 %v449, %v445
    %v670 = vpack.c.b16 %v450, %v446
    %v671 = vpack.c.b16 %v455, %v451
    %v672 = vpack.c.b16 %v456, %v452
    %v673 = vpack.c.b16 %v457, %v453
    %v674 = vpack.c.b16 %v458, %v454
    %v675 = vpack.c.b16 %v463, %v459
    %v676 = vpack.c.b16 %v464, %v460
    %v677 = vpack.c.b16 %v465, %v461
    %v678 = vpack.c.b16 %v466, %v462
    %v679 = vpack.c.b16 %v471, %v467
    %v680 = vpack.c.b16 %v472, %v468
    %v681 = vpack.c.b16 %v473, %v469
    %v682 = vpack.c.b16 %v474, %v470
    %v683 = vpack.c.b16 %v479, %v475
    %v684 = vpack.c.b16 %v480, %v476
    %v685 = vpack.c.b16 %v481, %v477
    %v686 = vpack.c.b16 %v482, %v478
    %v687 = vpack.c.b16 %v487, %v483
    %v688 = vpack.c.b16 %v488, %v484
    %v689 = vpack.c.b16 %v489, %v485
    %v690 = vpack.c.b16 %v490, %v486
    %v691 = vpack.c.b16 %v495, %v491
    %v692 = vpack.c.b16 %v496, %v492
    %v693 = vpack.c.b16 %v497, %v493
    %v694 = vpack.c.b16 %v498, %v494
    %v695 = vpack.c.b16 %v503, %v499
    %v696 = vpack.c.b16 %v504, %v500
    %v697 = vpack.c.b16 %v505, %v501
    %v698 = vpack.c.b16 %v506, %v502
    %v699 = vpack.c.b16 %v511, %v507
    %v700 = vpack.c.b16 %v512, %v508
    %v701 = vpack.c.b16 %v513, %v509
    %v702 = vpack.c.b16 %v514, %v510
    %v703 = vpack.c.b16 %v519, %v515
    %v704 = vpack.c.b16 %v520, %v516
    %v705 = vpack.c.b16 %v521, %v517
    %v706 = vpack.c.b16 %v522, %v518
    %v707 = vpack.c.b16 %v527, %v523
    %v708 = vpack.c.b16 %v528, %v524
    %v709 = vpack.c.b16 %v529, %v525
    %v710 = vpack.c.b16 %v530, %v526
    %v711 = vpack.c.b16 %v535, %v531
    %v712 = vpack.c.b16 %v536, %v532
    %v713 = vpack.c.b16 %v537, %v533
    %v714 = vpack.c.b16 %v538, %v534
    %v715 = vpack.c.b16 %v543, %v539
    %v716 = vpack.c.b16 %v544, %v540
    %v717 = vpack.c.b16 %v545, %v541
    %v718 = vpack.c.b16 %v546, %v542
    %v719 = vpack.c.b16 %v551, %v547
    %v720 = vpack.c.b16 %v552, %v548
    %v721 = vpack.c.b16 %v553, %v549
    %v722 = vpack.c.b16 %v554, %v550
    %v723 = vpack.c.b16 %v559, %v555
    %v724 = vpack.c.b16 %v560, %v556
    %v725 = vpack.c.b16 %v561, %v557
    %v726 = vpack.c.b16 %v562, %v558
    %v727 = vpack.c.b16 %v567, %v563
    %v728 = vpack.c.b16 %v568, %v564
    %v729 = vpack.c.b16 %v569, %v565
    %v730 = vpack.c.b16 %v570, %v566
    %v731 = vpack.c.b16 %v575, %v571
    %v732 = vpack.c.b16 %v576, %v572
    %v733 = vpack.c.b16 %v577, %v573
    %v734 = vpack.c.b16 %v578, %v574
    %v735 = vpack.c.b16 %v583, %v579
    %v736 = vpack.c.b16 %v584, %v580
    %v737 = vpack.c.b16 %v585, %v581
    %v738 = vpack.c.b16 %v586, %v582
    %v739 = vpack.c.b16 %v591, %v587
    %v740 = vpack.c.b16 %v592, %v588
    %v741 = vpack.c.b16 %v593, %v589
    %v742 = vpack.c.b16 %v594, %v590
    %v743 = vpack.c.b16 %v599, %v595
    %v744 = vpack.c.b16 %v600, %v596
    %v745 = vpack.c.b16 %v601, %v597
    %v746 = vpack.c.b16 %v602, %v598
    %v747 = vpack.c.b16 %v607, %v603
    %v748 = vpack.c.b16 %v608, %v604
    %v749 = vpack.c.b16 %v609, %v605
    %v750 = vpack.c.b16 %v610, %v606
    %v751 = vpack.c.b16 %v615, %v611
    %v752 = vpack.c.b16 %v616, %v612
    %v753 = vpack.c.b16 %v617, %v613
    %v754 = vpack.c.b16 %v618, %v614
    %v755 = vpack.c.b16 %v623, %v619
    %v756 = vpack.c.b16 %v624, %v620
    %v757 = vpack.c.b16 %v625, %v621
    %v758 = vpack.c.b16 %v626, %v622
    %v759 = vpack.c.b16 %v631, %v627
    %v760 = vpack.c.b16 %v632, %v628
    %v761 = vpack.c.b16 %v633, %v629
    %v762 = vpack.c.b16 %v634, %v630
    %891 = vmatprep.subr.bf16.mxu0 %v664
    %892 = vmatpush1.bf16.msra.mxu0 %v663
    %893 = vmatprep.subr.bf16.mxu0 %v660
    %894 = vmatpush1.bf16.msra.mxu0 %v659
    %895 = vmatprep.subr.bf16.mxu0 %v656
    %896 = vmatpush1.bf16.msra.mxu0 %v655
    %897 = vmatprep.subr.bf16.mxu0 %v652
    %898 = vmatpush1.bf16.msra.mxu0 %v651
    %899 = vmatprep.subr.bf16.mxu0 %v648
    %900 = vmatpush1.bf16.msra.mxu0 %v647
    %901 = vmatprep.subr.bf16.mxu0 %v644
    %902 = vmatpush1.bf16.msra.mxu0 %v643
    %903 = vmatprep.subr.bf16.mxu0 %v640
    %904 = vmatpush1.bf16.msra.mxu0 %v639
    %905 = vmatprep.subr.bf16.mxu0 %v636
    %906 = vmatpush1.bf16.msra.mxu0 %v635
    %907 = vmatprep.subr.bf16.mxu0 %v696
    %908 = vmatpush2.bf16.msra.mxu0 %v695
    %909 = vmatprep.subr.bf16.mxu0 %v692
    %910 = vmatpush2.bf16.msra.mxu0 %v691
    %911 = vmatprep.subr.bf16.mxu0 %v688
    %912 = vmatpush2.bf16.msra.mxu0 %v687
    %913 = vmatprep.subr.bf16.mxu0 %v684
    %914 = vmatpush2.bf16.msra.mxu0 %v683
    %915 = vmatprep.subr.bf16.mxu0 %v680
    %916 = vmatpush2.bf16.msra.mxu0 %v679
    %917 = vmatprep.subr.bf16.mxu0 %v676
    %918 = vmatpush2.bf16.msra.mxu0 %v675
    %919 = vmatprep.subr.bf16.mxu0 %v672
    %920 = vmatpush2.bf16.msra.mxu0 %v671
    %921 = vmatprep.subr.bf16.mxu0 %v668
    %922 = vmatpush2.bf16.msra.mxu0 %v667
    %923 = vmatprep.mubr.bf16.mxu0 %v244
    %924 = vmatmul.mubr.bf16.gmra.mxu0 %v243
    %v925 = vpop.f32.mrf.mxu0
    %v926 = vadd.f32 %v220, %v925
    %v927 = vpop.f32.mrf.mxu0
    %v928 = vadd.f32 %v224, %v927
    %v929 = vpop.f32.mrf.mxu0
    %v930 = vpop.f32.mrf.mxu0
    %931 = vdwg.mxu0
    %932 = vmatprep.subr.bf16.mxu0 %v728
    %933 = vmatpush1.bf16.msra.mxu0 %v727
    %934 = vmatprep.subr.bf16.mxu0 %v724
    %935 = vmatpush1.bf16.msra.mxu0 %v723
    %936 = vmatprep.subr.bf16.mxu0 %v720
    %937 = vmatpush1.bf16.msra.mxu0 %v719
    %938 = vmatprep.subr.bf16.mxu0 %v716
    %939 = vmatpush1.bf16.msra.mxu0 %v715
    %940 = vmatprep.subr.bf16.mxu0 %v712
    %941 = vmatpush1.bf16.msra.mxu0 %v711
    %942 = vmatprep.subr.bf16.mxu0 %v708
    %943 = vmatpush1.bf16.msra.mxu0 %v707
    %944 = vmatprep.subr.bf16.mxu0 %v704
    %945 = vmatpush1.bf16.msra.mxu0 %v703
    %946 = vmatprep.subr.bf16.mxu0 %v700
    %947 = vmatpush1.bf16.msra.mxu0 %v699
    %948 = vmatprep.subr.bf16.mxu0 %v760
    %949 = vmatpush2.bf16.msra.mxu0 %v759
    %950 = vmatprep.subr.bf16.mxu0 %v756
    %951 = vmatpush2.bf16.msra.mxu0 %v755
    %952 = vmatprep.subr.bf16.mxu0 %v752
    %953 = vmatpush2.bf16.msra.mxu0 %v751
    %954 = vmatprep.subr.bf16.mxu0 %v748
    %955 = vmatpush2.bf16.msra.mxu0 %v747
    %956 = vmatprep.subr.bf16.mxu0 %v744
    %957 = vmatpush2.bf16.msra.mxu0 %v743
    %958 = vmatprep.subr.bf16.mxu0 %v740
    %959 = vmatpush2.bf16.msra.mxu0 %v739
    %960 = vmatprep.subr.bf16.mxu0 %v736
    %961 = vmatpush2.bf16.msra.mxu0 %v735
    %962 = vmatprep.subr.bf16.mxu0 %v732
    %963 = vmatpush2.bf16.msra.mxu0 %v731
    %964 = vmatprep.mubr.bf16.mxu0 %v246
    %965 = vmatmul.mubr.bf16.gmra.mxu0 %v245
    %v966 = vpop.f32.mrf.mxu0
    %v967 = vadd.f32 %v926, %v966
    %v968 = vpop.f32.mrf.mxu0
    %v969 = vadd.f32 %v928, %v968
    %v970 = vpop.f32.mrf.mxu0
    %v971 = vpop.f32.mrf.mxu0
    %972 = vdwg.mxu0
    %973 = vmatprep.subr.bf16.mxu0 %v666
    %974 = vmatpush1.bf16.msra.mxu0 %v665
    %975 = vmatprep.subr.bf16.mxu0 %v662
    %976 = vmatpush1.bf16.msra.mxu0 %v661
    %977 = vmatprep.subr.bf16.mxu0 %v658
    %978 = vmatpush1.bf16.msra.mxu0 %v657
    %979 = vmatprep.subr.bf16.mxu0 %v654
    %980 = vmatpush1.bf16.msra.mxu0 %v653
    %981 = vmatprep.subr.bf16.mxu0 %v650
    %982 = vmatpush1.bf16.msra.mxu0 %v649
    %983 = vmatprep.subr.bf16.mxu0 %v646
    %984 = vmatpush1.bf16.msra.mxu0 %v645
    %985 = vmatprep.subr.bf16.mxu0 %v642
    %986 = vmatpush1.bf16.msra.mxu0 %v641
    %987 = vmatprep.subr.bf16.mxu0 %v638
    %988 = vmatpush1.bf16.msra.mxu0 %v637
    %989 = vmatprep.subr.bf16.mxu0 %v698
    %990 = vmatpush2.bf16.msra.mxu0 %v697
    %991 = vmatprep.subr.bf16.mxu0 %v694
    %992 = vmatpush2.bf16.msra.mxu0 %v693
    %993 = vmatprep.subr.bf16.mxu0 %v690
    %994 = vmatpush2.bf16.msra.mxu0 %v689
    %995 = vmatprep.subr.bf16.mxu0 %v686
    %996 = vmatpush2.bf16.msra.mxu0 %v685
    %997 = vmatprep.subr.bf16.mxu0 %v682
    %998 = vmatpush2.bf16.msra.mxu0 %v681
    %999 = vmatprep.subr.bf16.mxu0 %v678
    %1000 = vmatpush2.bf16.msra.mxu0 %v677
    %1001 = vmatprep.subr.bf16.mxu0 %v674
    %1002 = vmatpush2.bf16.msra.mxu0 %v673
    %1003 = vmatprep.subr.bf16.mxu0 %v670
    %1004 = vmatpush2.bf16.msra.mxu0 %v669
    %1005 = vmatprep.mubr.bf16.mxu0 %v244
    %1006 = vmatmul.mubr.bf16.gmra.mxu0 %v243
    %v1007 = vpop.f32.mrf.mxu0
    %v1008 = vadd.f32 %v228, %v1007
    %v1009 = vpop.f32.mrf.mxu0
    %v1010 = vadd.f32 %v232, %v1009
    %v1011 = vpop.f32.mrf.mxu0
    %v1012 = vpop.f32.mrf.mxu0
    %1013 = vdwg.mxu0
    %1014 = vmatprep.subr.bf16.mxu0 %v730
    %1015 = vmatpush1.bf16.msra.mxu0 %v729
    %1016 = vmatprep.subr.bf16.mxu0 %v726
    %1017 = vmatpush1.bf16.msra.mxu0 %v725
    %1018 = vmatprep.subr.bf16.mxu0 %v722
    %1019 = vmatpush1.bf16.msra.mxu0 %v721
    %1020 = vmatprep.subr.bf16.mxu0 %v718
    %1021 = vmatpush1.bf16.msra.mxu0 %v717
    %1022 = vmatprep.subr.bf16.mxu0 %v714
    %1023 = vmatpush1.bf16.msra.mxu0 %v713
    %1024 = vmatprep.subr.bf16.mxu0 %v710
    %1025 = vmatpush1.bf16.msra.mxu0 %v709
    %1026 = vmatprep.subr.bf16.mxu0 %v706
    %1027 = vmatpush1.bf16.msra.mxu0 %v705
    %1028 = vmatprep.subr.bf16.mxu0 %v702
    %1029 = vmatpush1.bf16.msra.mxu0 %v701
    %1030 = vmatprep.subr.bf16.mxu0 %v762
    %1031 = vmatpush2.bf16.msra.mxu0 %v761
    %1032 = vmatprep.subr.bf16.mxu0 %v758
    %1033 = vmatpush2.bf16.msra.mxu0 %v757
    %1034 = vmatprep.subr.bf16.mxu0 %v754
    %1035 = vmatpush2.bf16.msra.mxu0 %v753
    %1036 = vmatprep.subr.bf16.mxu0 %v750
    %1037 = vmatpush2.bf16.msra.mxu0 %v749
    %1038 = vmatprep.subr.bf16.mxu0 %v746
    %1039 = vmatpush2.bf16.msra.mxu0 %v745
    %1040 = vmatprep.subr.bf16.mxu0 %v742
    %1041 = vmatpush2.bf16.msra.mxu0 %v741
    %1042 = vmatprep.subr.bf16.mxu0 %v738
    %1043 = vmatpush2.bf16.msra.mxu0 %v737
    %1044 = vmatprep.subr.bf16.mxu0 %v734
    %1045 = vmatpush2.bf16.msra.mxu0 %v733
    %1046 = vmatprep.mubr.bf16.mxu0 %v246
    %1047 = vmatmul.mubr.bf16.gmra.mxu0 %v245
    %v1048 = vpop.f32.mrf.mxu0
    %v1049 = vadd.f32 %v1008, %v1048
    %v1050 = vpop.f32.mrf.mxu0
    %v1051 = vadd.f32 %v1010, %v1050
    %v1052 = vpop.f32.mrf.mxu0
    %v1053 = vpop.f32.mrf.mxu0
    %1054 = vdwg.mxu0
    %v1055 = vmax.f32 %v967, 0.0
    %v1056 = vmax.f32 %v969, 0.0
    %v1057 = vmax.f32 %v1049, 0.0
    %v1058 = vmax.f32 %v1051, 0.0
    %v1059 = vpack.c.bf16 %v1055, %v1055
    %v1060 = vpack.c.bf16 %v1056, %v1056
    %v1061 = vpack.c.bf16 %v1057, %v1057
    %v1062 = vpack.c.bf16 %v1058, %v1058
    %v1063 = vld [vmem:[#allocation9] sm:$0xf]
    %v1064 = vld [vmem:[#allocation9 + $0x4] sm:$0xf]
    %v1065 = vld [vmem:[#allocation9 + $0x8] sm:$0xf]
    %v1066 = vld [vmem:[#allocation9 + $0xc] sm:$0xf]
    %v1067 = vld [vmem:[#allocation9 + $0x10] sm:$0xf]
    %v1068 = vld [vmem:[#allocation9 + $0x14] sm:$0xf]
    %v1069 = vld [vmem:[#allocation9 + $0x18] sm:$0xf]
    %v1070 = vld [vmem:[#allocation9 + $0x1c] sm:$0xf]
    %v1071 = vld [vmem:[#allocation9 + $0x20] sm:$0xf]
    %v1072 = vld [vmem:[#allocation9 + $0x24] sm:$0xf]
    %v1073 = vld [vmem:[#allocation9 + $0x28] sm:$0xf]
    %v1074 = vld [vmem:[#allocation9 + $0x2c] sm:$0xf]
    %v1075 = vld [vmem:[#allocation9 + $0x30] sm:$0xf]
    %v1076 = vld [vmem:[#allocation9 + $0x34] sm:$0xf]
    %v1077 = vld [vmem:[#allocation9 + $0x38] sm:$0xf]
    %v1078 = vld [vmem:[#allocation9 + $0x3c] sm:$0xf]
    %v1079 = vld [vmem:[#allocation9 + $0x40] sm:$0xf]
    %v1080 = vld [vmem:[#allocation9 + $0x44] sm:$0xf]
    %v1081 = vld [vmem:[#allocation9 + $0x48] sm:$0xf]
    %v1082 = vld [vmem:[#allocation9 + $0x4c] sm:$0xf]
    %v1083 = vld [vmem:[#allocation9 + $0x50] sm:$0xf]
    %v1084 = vld [vmem:[#allocation9 + $0x54] sm:$0xf]
    %v1085 = vld [vmem:[#allocation9 + $0x58] sm:$0xf]
    %v1086 = vld [vmem:[#allocation9 + $0x5c] sm:$0xf]
    %v1087 = vld [vmem:[#allocation9 + $0x60] sm:$0xf]
    %v1088 = vld [vmem:[#allocation9 + $0x64] sm:$0xf]
    %v1089 = vld [vmem:[#allocation9 + $0x68] sm:$0xf]
    %v1090 = vld [vmem:[#allocation9 + $0x6c] sm:$0xf]
    %v1091 = vld [vmem:[#allocation9 + $0x70] sm:$0xf]
    %v1092 = vld [vmem:[#allocation9 + $0x74] sm:$0xf]
    %v1093 = vld [vmem:[#allocation9 + $0x78] sm:$0xf]
    %v1094 = vld [vmem:[#allocation9 + $0x7c] sm:$0xf]
    %v1095 = vld [vmem:[#allocation9 + $0x80] sm:$0xf]
    %v1096 = vld [vmem:[#allocation9 + $0x84] sm:$0xf]
    %v1097 = vld [vmem:[#allocation9 + $0x88] sm:$0xf]
    %v1098 = vld [vmem:[#allocation9 + $0x8c] sm:$0xf]
    %v1099 = vld [vmem:[#allocation9 + $0x90] sm:$0xf]
    %v1100 = vld [vmem:[#allocation9 + $0x94] sm:$0xf]
    %v1101 = vld [vmem:[#allocation9 + $0x98] sm:$0xf]
    %v1102 = vld [vmem:[#allocation9 + $0x9c] sm:$0xf]
    %v1103 = vld [vmem:[#allocation9 + $0xa0] sm:$0xf]
    %v1104 = vld [vmem:[#allocation9 + $0xa4] sm:$0xf]
    %v1105 = vld [vmem:[#allocation9 + $0xa8] sm:$0xf]
    %v1106 = vld [vmem:[#allocation9 + $0xac] sm:$0xf]
    %v1107 = vld [vmem:[#allocation9 + $0xb0] sm:$0xf]
    %v1108 = vld [vmem:[#allocation9 + $0xb4] sm:$0xf]
    %v1109 = vld [vmem:[#allocation9 + $0xb8] sm:$0xf]
    %v1110 = vld [vmem:[#allocation9 + $0xbc] sm:$0xf]
    %v1111 = vld [vmem:[#allocation9 + $0xc0] sm:$0xf]
    %v1112 = vld [vmem:[#allocation9 + $0xc4] sm:$0xf]
    %v1113 = vld [vmem:[#allocation9 + $0xc8] sm:$0xf]
    %v1114 = vld [vmem:[#allocation9 + $0xcc] sm:$0xf]
    %v1115 = vld [vmem:[#allocation9 + $0xd0] sm:$0xf]
    %v1116 = vld [vmem:[#allocation9 + $0xd4] sm:$0xf]
    %v1117 = vld [vmem:[#allocation9 + $0xd8] sm:$0xf]
    %v1118 = vld [vmem:[#allocation9 + $0xdc] sm:$0xf]
    %v1119 = vld [vmem:[#allocation9 + $0xe0] sm:$0xf]
    %v1120 = vld [vmem:[#allocation9 + $0xe4] sm:$0xf]
    %v1121 = vld [vmem:[#allocation9 + $0xe8] sm:$0xf]
    %v1122 = vld [vmem:[#allocation9 + $0xec] sm:$0xf]
    %v1123 = vld [vmem:[#allocation9 + $0xf0] sm:$0xf]
    %v1124 = vld [vmem:[#allocation9 + $0xf4] sm:$0xf]
    %v1125 = vld [vmem:[#allocation9 + $0xf8] sm:$0xf]
    %v1126 = vld [vmem:[#allocation9 + $0xfc] sm:$0xf]
    %v1127 = vld [vmem:[%s5] sm:$0x1]
    %v1129 = vlaneseq
    %v1130 = vshrl.u32 %v1129, 7
    %v1131 = vsub.s32 0, %v1130
    %v1132 = vrot.slane %v1127, %v1131
    %v1198 = vunpack.c.l.b16 %v1063
    %v1199 = vunpack.c.l.b16 %v1064
    %v1200 = vunpack.c.l.b16 %v1065
    %v1201 = vunpack.c.l.b16 %v1066
    %v1202 = vunpack.c.l.b16 %v1067
    %v1203 = vunpack.c.l.b16 %v1068
    %v1204 = vunpack.c.l.b16 %v1069
    %v1205 = vunpack.c.l.b16 %v1070
    %v1206 = vunpack.c.l.b16 %v1071
    %v1207 = vunpack.c.l.b16 %v1072
    %v1208 = vunpack.c.l.b16 %v1073
    %v1209 = vunpack.c.l.b16 %v1074
    %v1210 = vunpack.c.l.b16 %v1075
    %v1211 = vunpack.c.l.b16 %v1076
    %v1212 = vunpack.c.l.b16 %v1077
    %v1213 = vunpack.c.l.b16 %v1078
    %v1214 = vunpack.c.l.b16 %v1079
    %v1215 = vunpack.c.l.b16 %v1080
    %v1216 = vunpack.c.l.b16 %v1081
    %v1217 = vunpack.c.l.b16 %v1082
    %v1218 = vunpack.c.l.b16 %v1083
    %v1219 = vunpack.c.l.b16 %v1084
    %v1220 = vunpack.c.l.b16 %v1085
    %v1221 = vunpack.c.l.b16 %v1086
    %v1222 = vunpack.c.l.b16 %v1087
    %v1223 = vunpack.c.l.b16 %v1088
    %v1224 = vunpack.c.l.b16 %v1089
    %v1225 = vunpack.c.l.b16 %v1090
    %v1226 = vunpack.c.l.b16 %v1091
    %v1227 = vunpack.c.l.b16 %v1092
    %v1228 = vunpack.c.l.b16 %v1093
    %v1229 = vunpack.c.l.b16 %v1094
    %v1230 = vunpack.c.l.b16 %v1095
    %v1231 = vunpack.c.l.b16 %v1096
    %v1232 = vunpack.c.l.b16 %v1097
    %v1233 = vunpack.c.l.b16 %v1098
    %v1234 = vunpack.c.l.b16 %v1099
    %v1235 = vunpack.c.l.b16 %v1100
    %v1236 = vunpack.c.l.b16 %v1101
    %v1237 = vunpack.c.l.b16 %v1102
    %v1238 = vunpack.c.l.b16 %v1103
    %v1239 = vunpack.c.l.b16 %v1104
    %v1240 = vunpack.c.l.b16 %v1105
    %v1241 = vunpack.c.l.b16 %v1106
    %v1242 = vunpack.c.l.b16 %v1107
    %v1243 = vunpack.c.l.b16 %v1108
    %v1244 = vunpack.c.l.b16 %v1109
    %v1245 = vunpack.c.l.b16 %v1110
    %v1246 = vunpack.c.l.b16 %v1111
    %v1247 = vunpack.c.l.b16 %v1112
    %v1248 = vunpack.c.l.b16 %v1113
    %v1249 = vunpack.c.l.b16 %v1114
    %v1250 = vunpack.c.l.b16 %v1115
    %v1251 = vunpack.c.l.b16 %v1116
    %v1252 = vunpack.c.l.b16 %v1117
    %v1253 = vunpack.c.l.b16 %v1118
    %v1254 = vunpack.c.l.b16 %v1119
    %v1255 = vunpack.c.l.b16 %v1120
    %v1256 = vunpack.c.l.b16 %v1121
    %v1257 = vunpack.c.l.b16 %v1122
    %v1258 = vunpack.c.l.b16 %v1123
    %v1259 = vunpack.c.l.b16 %v1124
    %v1260 = vunpack.c.l.b16 %v1125
    %v1261 = vunpack.c.l.b16 %v1126
    %v1262 = vpack.c.b16 %v1199, %v1198
    %v1263 = vpack.c.b16 %v1201, %v1200
    %v1264 = vpack.c.b16 %v1203, %v1202
    %v1265 = vpack.c.b16 %v1205, %v1204
    %v1266 = vpack.c.b16 %v1207, %v1206
    %v1267 = vpack.c.b16 %v1209, %v1208
    %v1268 = vpack.c.b16 %v1211, %v1210
    %v1269 = vpack.c.b16 %v1213, %v1212
    %v1270 = vpack.c.b16 %v1215, %v1214
    %v1271 = vpack.c.b16 %v1217, %v1216
    %v1272 = vpack.c.b16 %v1219, %v1218
    %v1273 = vpack.c.b16 %v1221, %v1220
    %v1274 = vpack.c.b16 %v1223, %v1222
    %v1275 = vpack.c.b16 %v1225, %v1224
    %v1276 = vpack.c.b16 %v1227, %v1226
    %v1277 = vpack.c.b16 %v1229, %v1228
    %v1278 = vpack.c.b16 %v1231, %v1230
    %v1279 = vpack.c.b16 %v1233, %v1232
    %v1280 = vpack.c.b16 %v1235, %v1234
    %v1281 = vpack.c.b16 %v1237, %v1236
    %v1282 = vpack.c.b16 %v1239, %v1238
    %v1283 = vpack.c.b16 %v1241, %v1240
    %v1284 = vpack.c.b16 %v1243, %v1242
    %v1285 = vpack.c.b16 %v1245, %v1244
    %v1286 = vpack.c.b16 %v1247, %v1246
    %v1287 = vpack.c.b16 %v1249, %v1248
    %v1288 = vpack.c.b16 %v1251, %v1250
    %v1289 = vpack.c.b16 %v1253, %v1252
    %v1290 = vpack.c.b16 %v1255, %v1254
    %v1291 = vpack.c.b16 %v1257, %v1256
    %v1292 = vpack.c.b16 %v1259, %v1258
    %v1293 = vpack.c.b16 %v1261, %v1260
    %1326 = vmatprep.subr.bf16.mxu0 0
    %1327 = vmatpush1.bf16.msra.mxu0 %v1269
    %1328 = vmatprep.subr.bf16.mxu0 0
    %1329 = vmatpush1.bf16.msra.mxu0 %v1268
    %1330 = vmatprep.subr.bf16.mxu0 0
    %1331 = vmatpush1.bf16.msra.mxu0 %v1267
    %1332 = vmatprep.subr.bf16.mxu0 0
    %1333 = vmatpush1.bf16.msra.mxu0 %v1266
    %1334 = vmatprep.subr.bf16.mxu0 0
    %1335 = vmatpush1.bf16.msra.mxu0 %v1265
    %1336 = vmatprep.subr.bf16.mxu0 0
    %1337 = vmatpush1.bf16.msra.mxu0 %v1264
    %1338 = vmatprep.subr.bf16.mxu0 0
    %1339 = vmatpush1.bf16.msra.mxu0 %v1263
    %1340 = vmatprep.subr.bf16.mxu0 0
    %1341 = vmatpush1.bf16.msra.mxu0 %v1262
    %1342 = vmatprep.subr.bf16.mxu0 0
    %1343 = vmatpush2.bf16.msra.mxu0 %v1277
    %1344 = vmatprep.subr.bf16.mxu0 0
    %1345 = vmatpush2.bf16.msra.mxu0 %v1276
    %1346 = vmatprep.subr.bf16.mxu0 0
    %1347 = vmatpush2.bf16.msra.mxu0 %v1275
    %1348 = vmatprep.subr.bf16.mxu0 0
    %1349 = vmatpush2.bf16.msra.mxu0 %v1274
    %1350 = vmatprep.subr.bf16.mxu0 0
    %1351 = vmatpush2.bf16.msra.mxu0 %v1273
    %1352 = vmatprep.subr.bf16.mxu0 0
    %1353 = vmatpush2.bf16.msra.mxu0 %v1272
    %1354 = vmatprep.subr.bf16.mxu0 0
    %1355 = vmatpush2.bf16.msra.mxu0 %v1271
    %1356 = vmatprep.subr.bf16.mxu0 0
    %1357 = vmatpush2.bf16.msra.mxu0 %v1270
    %1358 = vmatprep.mubr.bf16.mxu0 %v1060
    %1359 = vmatmul.mubr.bf16.gmra.mxu0 %v1059
    %v1360 = vpop.f32.mrf.mxu0
    %v1361 = vadd.f32 %v1132, %v1360
    %v1362 = vpop.f32.mrf.mxu0
    %v1363 = vpop.f32.mrf.mxu0
    %v1364 = vpop.f32.mrf.mxu0
    %1365 = vdwg.mxu0
    %1366 = vmatprep.subr.bf16.mxu0 0
    %1367 = vmatpush1.bf16.msra.mxu0 %v1285
    %1368 = vmatprep.subr.bf16.mxu0 0
    %1369 = vmatpush1.bf16.msra.mxu0 %v1284
    %1370 = vmatprep.subr.bf16.mxu0 0
    %1371 = vmatpush1.bf16.msra.mxu0 %v1283
    %1372 = vmatprep.subr.bf16.mxu0 0
    %1373 = vmatpush1.bf16.msra.mxu0 %v1282
    %1374 = vmatprep.subr.bf16.mxu0 0
    %1375 = vmatpush1.bf16.msra.mxu0 %v1281
    %1376 = vmatprep.subr.bf16.mxu0 0
    %1377 = vmatpush1.bf16.msra.mxu0 %v1280
    %1378 = vmatprep.subr.bf16.mxu0 0
    %1379 = vmatpush1.bf16.msra.mxu0 %v1279
    %1380 = vmatprep.subr.bf16.mxu0 0
    %1381 = vmatpush1.bf16.msra.mxu0 %v1278
    %1382 = vmatprep.subr.bf16.mxu0 0
    %1383 = vmatpush2.bf16.msra.mxu0 %v1293
    %1384 = vmatprep.subr.bf16.mxu0 0
    %1385 = vmatpush2.bf16.msra.mxu0 %v1292
    %1386 = vmatprep.subr.bf16.mxu0 0
    %1387 = vmatpush2.bf16.msra.mxu0 %v1291
    %1388 = vmatprep.subr.bf16.mxu0 0
    %1389 = vmatpush2.bf16.msra.mxu0 %v1290
    %1390 = vmatprep.subr.bf16.mxu0 0
    %1391 = vmatpush2.bf16.msra.mxu0 %v1289
    %1392 = vmatprep.subr.bf16.mxu0 0
    %1393 = vmatpush2.bf16.msra.mxu0 %v1288
    %1394 = vmatprep.subr.bf16.mxu0 0
    %1395 = vmatpush2.bf16.msra.mxu0 %v1287
    %1396 = vmatprep.subr.bf16.mxu0 0
    %1397 = vmatpush2.bf16.msra.mxu0 %v1286
    %1398 = vmatprep.mubr.bf16.mxu0 %v1062
    %1399 = vmatmul.mubr.bf16.gmra.mxu0 %v1061
    %v1400 = vpop.f32.mrf.mxu0
    %v1401 = vadd.f32 %v1361, %v1400
    %v1402 = vpop.f32.mrf.mxu0
    %v1403 = vpop.f32.mrf.mxu0
    %v1404 = vpop.f32.mrf.mxu0
    %1405 = vdwg.mxu0
    %1406 = vst [vmem:[#allocation11] sm:$0xff] %v1401
    // Predicated region
    $region42: #{tpu_custom_call.1} parent=1 // pred_check
      _
    $region43: #{tpu_custom_call.1} parent=1 // pred_check_branch
      %1408 = sbr.rel (0) target = $region45
    $region44: #{tpu_custom_call.1} parent=1 // pred_region
      %s1410 = ssub.s32 128, 128
      %1411 = vsyncadd [#allocation5], %s1410
      %s1413 = sshll.u32 [#allocation11], 4
      %s1414 = int_to_ptr.vmem [resolvable:$true] %s1413
      %1416 = dma.vmem_to_hbm [thread:$0]  %s1414, 128, %s6, [#allocation5]
    $region45: #{tpu_custom_call.1} parent=1 // pred_fallthru
      _
    // Predicated region
    $region46: #{tpu_custom_call.1} parent=1 // pred_check
      _
    $region47: #{tpu_custom_call.1} parent=1 // pred_check_branch
      %1418 = sbr.rel (0) target = $region49
    $region48: #{tpu_custom_call.1} parent=1 // pred_region
      %1419 = dma.done [#allocation5], 128
    $region49: #{tpu_custom_call.1} parent=1 // pred_fallthru
      _
    %1420 = vsyncpa [#allocation4], 1
    %1421 = vsyncpa [#allocation7], 1
    %1422 = vsyncpa [#allocation10], 1
    %1423 = vsyncpa [#allocation5], 1

</llo_original>
